<compile_context>
chip_gen: v7x
topology: tpu7x:2x2x1
jax: 0.10.0
libtpu: 0.0.40
codegen_flags: <defaults>
</compile_context>

<pallas_src>
import numpy as np

import jax
import jax.numpy as jnp
from jax.experimental import pallas as pl
from jax.experimental.pallas import tpu as pltpu


def _round_up(x, m):
    return ((x + m - 1) // m) * m


def _cdiv(a, b):
    return (a + b - 1) // b


def _default_vmem_limit():
    try:
        kind = jax.devices()[0].device_kind.lower()
    except Exception:
        kind = ""
    if "v7" in kind:
        return 48 * 1024 * 1024   # 64 MiB physical VMEM per TC on v7x
    return 64 * 1024 * 1024       # 128 MiB physical on v4/v5e/v5p/v6e


def _make_kernel(hp, tn, w2_resident, approx_sigmoid):
    def lxr_kernel(u_ref, it_ref,
                   wu_ref, bu_ref,
                   wi_ref, bi_ref,
                   w1_ref, b1_ref,
                   w2_ref, b2_ref,
                   out_ref, h_ref):
        # Stage 1: the bottleneck hidden state depends only on the batch tile.
        # Compute it once when the inner (item/output) grid axis is at 0 and
        # cache it in VMEM scratch.  Correct because the n axis is the inner,
        # sequentially iterated ("arbitrary") axis.
        @pl.when(pl.program_id(1) == 0)
        def _():
            user_out = jnp.tanh(
                jnp.dot(u_ref[...], wu_ref[...],
                        preferred_element_type=jnp.float32) + bu_ref[...])
            item_out = jnp.tanh(
                jnp.dot(it_ref[...], wi_ref[...],
                        preferred_element_type=jnp.float32) + bi_ref[...])
            # cat([a, b], -1) @ W1 == a @ W1[:H] + b @ W1[H:]
            # (static sublane slices of the resident W1 are free; avoids the
            #  (tb, 2H) f32 concat temp / extra cast).
            h = (jnp.dot(user_out.astype(w1_ref.dtype), w1_ref[0:hp, :],
                         preferred_element_type=jnp.float32)
                 + jnp.dot(item_out.astype(w1_ref.dtype), w1_ref[hp:2 * hp, :],
                           preferred_element_type=jnp.float32)
                 + b1_ref[...])
            h_ref[...] = jnp.tanh(h).astype(h_ref.dtype)

        # Stage 2: per output (item) tile: Linear(H -> tn) + Sigmoid.
        if w2_resident:
            # W2/b2 live fully in VMEM; take the 128-aligned slice for tile n.
            j = pl.multiple_of(pl.program_id(1) * tn, 128)
            w2t = w2_ref[:, pl.ds(j, tn)]
            b2t = b2_ref[:, pl.ds(j, tn)]
        else:
            w2t = w2_ref[...]
            b2t = b2_ref[...]
        logits = jnp.dot(h_ref[...], w2t,
                         preferred_element_type=jnp.float32) + b2t
        if approx_sigmoid:
            # sigmoid(x) = 1 / (1 + exp(-x)); approx reciprocal stays on the
            # EUP slot and skips exact-divide refinement.
            out = pl.reciprocal(1.0 + jnp.exp(-logits), approx=True)
        else:
            out = jax.nn.sigmoid(logits)
        out_ref[...] = out.astype(out_ref.dtype)

    return lxr_kernel


def lxr_explainer_forward(user_tensor, item_tensor, params, *,
                          block_b=256, block_n=1024,
                          compute_dtype=jnp.bfloat16,
                          out_dtype=jnp.bfloat16,
                          vmem_limit_bytes=None):
    """params: unpadded f32 dict with (in, out)-layout weights, (1, out) biases."""
    B, user_size = user_tensor.shape
    _, item_size = item_tensor.shape
    hidden_size = params["wu"].shape[1]

    if vmem_limit_bytes is None:
        vmem_limit_bytes = _default_vmem_limit()

    cd = np.dtype(compute_dtype)
    od = np.dtype(out_dtype)
    cd_b, od_b = cd.itemsize, od.itemsize
    approx_sigmoid = cd != np.dtype(jnp.float32)

    # Lane-dense padded feature dims (exact: zeros contribute nothing).
    hp = _round_up(hidden_size, 128)
    up = _round_up(user_size, 128)

    # ---- Tile selection: derive tile sizes from tile *counts* so awkward
    # B / item_size don't nearly double the padded (wasted) work. -------------
    def batch_tiling(cap):
        nb = _cdiv(B, max(cap, 8))
        tb = _round_up(_cdiv(B, nb), 8)
        return nb, tb, nb * tb

    def item_tiling(cap):
        nn = _cdiv(item_size, max(cap, 128))
        tn = _round_up(_cdiv(item_size, nn), 128)
        return nn, tn, nn * tn

    def vbytes(rows, cols, itemsize):
        return _round_up(max(rows, 1), 8) * _round_up(cols, 128) * itemsize

    def footprint(tb, tn, npad, w2_res):
        # Single-buffered constants.
        const = (vbytes(up, hp, cd_b) + vbytes(1, hp, 4)          # Wu, bu
                 + vbytes(npad, hp, cd_b) + vbytes(1, hp, 4)      # Wi, bi
                 + vbytes(2 * hp, hp, cd_b) + vbytes(1, hp, 4))   # W1, b1
        if w2_res:
            const += vbytes(hp, npad, cd_b) + vbytes(1, npad, 4)  # W2, b2
            w2_stream = 0
        else:
            w2_stream = 2 * (vbytes(hp, tn, cd_b) + vbytes(1, tn, 4))
        stream = (2 * vbytes(tb, up, cd_b)          # user tile
                  + 2 * vbytes(tb, npad, cd_b)      # item tile
                  + 2 * vbytes(tb, tn, od_b)        # output tile
                  + w2_stream)
        scratch = vbytes(tb, hp, cd_b)
        return const + stream + scratch

    budget = int(vmem_limit_bytes * 0.85)
    nb, tb, bpad = batch_tiling(block_b)
    nn, tn, npad = item_tiling(block_n)
    while True:
        if footprint(tb, tn, npad, True) <= budget:
            w2_resident = True
            break
        if footprint(tb, tn, npad, False) <= budget:
            w2_resident = False
            break
        if tb > 8:
            nb, tb, bpad = batch_tiling(tb // 2)
        elif tn > 128:
            nn, tn, npad = item_tiling(tn // 2)
        else:
            # Smallest tiles already; let the compiler manage what's left.
            # TODO(synk): K-tile stage 1 over the item dim for catalogs so
            # large that even the minimal (8, npad) item tile + Wi overflow
            # VMEM (relevant mostly on v7x's 64 MiB).
            w2_resident = False
            break

    # ---- Host-side zero padding (mathematically exact). ---------------------
    def pad2(a, rows, cols):
        return jnp.pad(a, ((0, rows - a.shape[0]), (0, cols - a.shape[1])))

    u = pad2(user_tensor, bpad, up).astype(cd)
    it = pad2(item_tensor, bpad, npad).astype(cd)
    wu = pad2(params["wu"], up, hp).astype(cd)
    wi = pad2(params["wi"], npad, hp).astype(cd)
    # (2H, H) -> (2Hp, Hp): row blocks must line up with the [user | item] halves.
    w1 = jnp.zeros((2 * hp, hp), jnp.float32)
    w1 = w1.at[:hidden_size, :hidden_size].set(params["w1"][:hidden_size])
    w1 = w1.at[hp:hp + hidden_size, :hidden_size].set(params["w1"][hidden_size:])
    w1 = w1.astype(cd)
    w2 = pad2(params["w2"], hp, npad).astype(cd)
    bu = pad2(params["bu"], 1, hp).astype(jnp.float32)
    bi = pad2(params["bi"], 1, hp).astype(jnp.float32)
    b1 = pad2(params["b1"], 1, hp).astype(jnp.float32)
    b2 = pad2(params["b2"], 1, npad).astype(jnp.float32)

    # ---- BlockSpecs ----------------------------------------------------------
    def resident(a):
        # Constant index_map -> the block never changes across the grid;
        # single-buffer it (Buffered(1)) so the default double-buffering
        # doesn't pay 2x VMEM for static weights.
        return pl.BlockSpec(a.shape, lambda b, n, _nd=a.ndim: (0,) * _nd,
                            pipeline_mode=pl.Buffered(1))

    if w2_resident:
        w2_spec, b2_spec = resident(w2), resident(b2)
    else:
        # Streamed fallback (W2 re-read once per batch tile). Default 2-deep
        # buffering keeps VMEM headroom on this capacity-constrained path.
        w2_spec = pl.BlockSpec((hp, tn), lambda b, n: (0, n))
        b2_spec = pl.BlockSpec((1, tn), lambda b, n: (0, n))

    in_specs = [
        pl.BlockSpec((tb, up), lambda b, n: (b, 0)),     # user tile
        pl.BlockSpec((tb, npad), lambda b, n: (b, 0)),   # item tile
        resident(wu), resident(bu),
        resident(wi), resident(bi),
        resident(w1), resident(b1),
        w2_spec, b2_spec,
    ]
    out_specs = pl.BlockSpec((tb, tn), lambda b, n: (b, n))

    args = (u, it, wu, bu, wi, bi, w1, b1, w2, b2)

    # ---- Advisory cost estimate (counts W2 once per actual HBM read). -------
    flops = 2 * bpad * (up * hp + npad * hp + 2 * hp * hp + hp * npad)
    transcendentals = bpad * (3 * hp + npad)
    const_bytes = sum(int(a.size) * a.dtype.itemsize
                      for a in (wu, bu, wi, bi, w1, b1))
    w2_bytes = int(w2.size) * w2.dtype.itemsize + int(b2.size) * b2.dtype.itemsize
    w2_reads = 1 if w2_resident else nb
    bytes_accessed = (int(u.size) * cd_b + int(it.size) * cd_b
                      + const_bytes + w2_reads * w2_bytes
                      + bpad * npad * od_b)

    kernel = _make_kernel(hp, tn, w2_resident, approx_sigmoid)

    out = pl.pallas_call(
        kernel,
        out_shape=jax.ShapeDtypeStruct((bpad, npad), od),
        grid_spec=pltpu.PrefetchScalarGridSpec(
            num_scalar_prefetch=0,
            grid=(nb, nn),
            in_specs=in_specs,
            out_specs=out_specs,
            scratch_shapes=[pltpu.VMEM((tb, hp), cd)],
        ),
        compiler_params=pltpu.CompilerParams(
            # Batch axis is megacore-parallel; the item/output axis must stay
            # sequential ("arbitrary") so the h_ref caching at n == 0 is valid.
            # TODO(synk): when nb == 1 (tiny explainer batches) one TC idles on
            # v7x; splitting stage 1 into its own call and parallelizing the n
            # axis would fix that but needs a per-core valid hidden state.
            dimension_semantics=("parallel", "arbitrary"),
            vmem_limit_bytes=int(vmem_limit_bytes),
        ),
        cost_estimate=pl.CostEstimate(
            flops=int(flops),
            transcendentals=int(transcendentals),
            bytes_accessed=int(bytes_accessed),
        ),
    )(*args)

    return out[:B, :item_size]


def init_params(key, user_size, item_size, hidden_size):
    ks = jax.random.split(key, 8)
    s = 0.05
    return {
        "wu": s * jax.random.normal(ks[0], (user_size, hidden_size), jnp.float32),
        "bu": s * jax.random.normal(ks[1], (1, hidden_size), jnp.float32),
        "wi": s * jax.random.normal(ks[2], (item_size, hidden_size), jnp.float32),
        "bi": s * jax.random.normal(ks[3], (1, hidden_size), jnp.float32),
        "w1": s * jax.random.normal(ks[4], (2 * hidden_size, hidden_size), jnp.float32),
        "b1": s * jax.random.normal(ks[5], (1, hidden_size), jnp.float32),
        "w2": s * jax.random.normal(ks[6], (hidden_size, item_size), jnp.float32),
        "b2": s * jax.random.normal(ks[7], (1, item_size), jnp.float32),
    }


def reference_forward(user_tensor, item_tensor, p):
    hi = jax.lax.Precision.HIGHEST
    uo = jnp.dot(user_tensor.astype(jnp.float32), p["wu"], precision=hi) + p["bu"]
    io = jnp.dot(item_tensor.astype(jnp.float32), p["wi"], precision=hi) + p["bi"]
    combined = jnp.concatenate([uo, io], axis=-1)
    h = jnp.tanh(jnp.dot(jnp.tanh(combined), p["w1"], precision=hi) + p["b1"])
    return jax.nn.sigmoid(jnp.dot(h, p["w2"], precision=hi) + p["b2"])


if __name__ == "__main__":
    B, user_size, item_size, hidden_size = 8, 32, 256, 32

    key = jax.random.PRNGKey(0)
    kp, ku, ki = jax.random.split(key, 3)
    params = init_params(kp, user_size, item_size, hidden_size)
    user_tensor = jax.random.normal(ku, (B, user_size), jnp.float32)
    # item_tensor in LXR is typically a (multi-)hot interaction vector over items.
    item_tensor = (jax.random.uniform(ki, (B, item_size)) < 0.1).astype(jnp.float32)

    ref = reference_forward(user_tensor, item_tensor, params)

    # Exact-precision path (f32 compute, f32 output, exact sigmoid).
    out_f32 = lxr_explainer_forward(user_tensor, item_tensor, params,
                                    compute_dtype=jnp.float32,
                                    out_dtype=jnp.float32)
    out_f32 = jax.block_until_ready(out_f32)
    assert out_f32.shape == (B, item_size)
    assert jnp.allclose(out_f32, ref, atol=1e-4, rtol=1e-4)

    # Production path (bf16 inputs/weights/output, f32 accumulation,
    # approx-reciprocal sigmoid) — looser tolerance by design.
    out_bf16 = lxr_explainer_forward(user_tensor, item_tensor, params,
                                     compute_dtype=jnp.bfloat16,
                                     out_dtype=jnp.bfloat16)
    out_bf16 = jax.block_until_ready(out_bf16)
    assert out_bf16.shape == (B, item_size)
    assert jnp.allclose(out_bf16.astype(jnp.float32), ref, atol=1e-2, rtol=0)

    print("KERNEL_OK")
</pallas_src>

<mosaic_0001>
module attributes {stable_mosaic.version = 11 : i64} {
  func.func @lxr_kernel(%arg0: i32, %arg1: i32, %arg2: memref<8x128xf32, #tpu.memory_space<vmem>>, %arg3: memref<8x256xf32, #tpu.memory_space<vmem>>, %arg4: memref<128x128xf32, #tpu.memory_space<vmem>>, %arg5: memref<1x128xf32, #tpu.memory_space<vmem>>, %arg6: memref<256x128xf32, #tpu.memory_space<vmem>>, %arg7: memref<1x128xf32, #tpu.memory_space<vmem>>, %arg8: memref<256x128xf32, #tpu.memory_space<vmem>>, %arg9: memref<1x128xf32, #tpu.memory_space<vmem>>, %arg10: memref<128x256xf32, #tpu.memory_space<vmem>>, %arg11: memref<1x256xf32, #tpu.memory_space<vmem>>, %arg12: memref<8x256xf32, #tpu.memory_space<vmem>>, %arg13: memref<8x128xf32, #tpu.memory_space<vmem>>) attributes {dimension_semantics = [#tpu.dimension_semantics<parallel>, #tpu.dimension_semantics<arbitrary>], iteration_bounds = array<i64: 1, 1>, scalar_prefetch = 0 : i64, scratch_operands = 1 : i64, tpu.core_type = #tpu.core_type<tc>, window_params = [{transform_indices = @transform_0, window_bounds = array<i64: 8, 128>}, {transform_indices = @transform_1, window_bounds = array<i64: 8, 256>}, {pipeline_mode = #tpu.pipeline_mode<synchronous>, transform_indices = @transform_2, window_bounds = array<i64: 128, 128>}, {pipeline_mode = #tpu.pipeline_mode<synchronous>, transform_indices = @transform_3, window_bounds = array<i64: 1, 128>}, {pipeline_mode = #tpu.pipeline_mode<synchronous>, transform_indices = @transform_4, window_bounds = array<i64: 256, 128>}, {pipeline_mode = #tpu.pipeline_mode<synchronous>, transform_indices = @transform_5, window_bounds = array<i64: 1, 128>}, {pipeline_mode = #tpu.pipeline_mode<synchronous>, transform_indices = @transform_6, window_bounds = array<i64: 256, 128>}, {pipeline_mode = #tpu.pipeline_mode<synchronous>, transform_indices = @transform_7, window_bounds = array<i64: 1, 128>}, {pipeline_mode = #tpu.pipeline_mode<synchronous>, transform_indices = @transform_8, window_bounds = array<i64: 128, 256>}, {pipeline_mode = #tpu.pipeline_mode<synchronous>, transform_indices = @transform_9, window_bounds = array<i64: 1, 256>}, {transform_indices = @transform_10, window_bounds = array<i64: 8, 256>}]} {
    %c0_i32 = arith.constant 0 : i32
    %0 = arith.cmpi eq, %arg1, %c0_i32 : i32
    %1 = arith.extui %0 : i1 to i32
    %c0_i32_0 = arith.constant 0 : i32
    %2 = arith.cmpi ne, %1, %c0_i32_0 : i32
    scf.if %2 {
      %c0_7 = arith.constant 0 : index
      %c0_8 = arith.constant 0 : index
      %19 = vector.load %arg2[%c0_7, %c0_8] : memref<8x128xf32, #tpu.memory_space<vmem>>, vector<8x128xf32>
      %c0_9 = arith.constant 0 : index
      %c0_10 = arith.constant 0 : index
      %20 = vector.load %arg4[%c0_9, %c0_10] : memref<128x128xf32, #tpu.memory_space<vmem>>, vector<128x128xf32>
      %cst_11 = arith.constant dense<0.000000e+00> : vector<8x128xf32>
      %21 = tpu.matmul %19, %20, %cst_11 {dimension_numbers = #tpu.dot_dimension_numbers<[1], [0], [0], [1], [0, 0, 1, 1], [], []>} : vector<8x128xf32>, vector<128x128xf32>, vector<8x128xf32> -> vector<8x128xf32>
      %c0_12 = arith.constant 0 : index
      %c0_13 = arith.constant 0 : index
      %22 = vector.load %arg5[%c0_12, %c0_13] : memref<1x128xf32, #tpu.memory_space<vmem>>, vector<1x128xf32>
      %23 = vector.broadcast %22 : vector<1x128xf32> to vector<8x128xf32>
      %24 = arith.addf %21, %23 : vector<8x128xf32>
      %25 = math.tanh %24 : vector<8x128xf32>
      %c0_14 = arith.constant 0 : index
      %c0_15 = arith.constant 0 : index
      %26 = vector.load %arg3[%c0_14, %c0_15] : memref<8x256xf32, #tpu.memory_space<vmem>>, vector<8x256xf32>
      %c0_16 = arith.constant 0 : index
      %c0_17 = arith.constant 0 : index
      %27 = vector.load %arg6[%c0_16, %c0_17] : memref<256x128xf32, #tpu.memory_space<vmem>>, vector<256x128xf32>
      %cst_18 = arith.constant dense<0.000000e+00> : vector<8x128xf32>
      %28 = tpu.matmul %26, %27, %cst_18 {dimension_numbers = #tpu.dot_dimension_numbers<[1], [0], [0], [1], [0, 0, 1, 1], [], []>} : vector<8x256xf32>, vector<256x128xf32>, vector<8x128xf32> -> vector<8x128xf32>
      %c0_19 = arith.constant 0 : index
      %c0_20 = arith.constant 0 : index
      %29 = vector.load %arg7[%c0_19, %c0_20] : memref<1x128xf32, #tpu.memory_space<vmem>>, vector<1x128xf32>
      %30 = vector.broadcast %29 : vector<1x128xf32> to vector<8x128xf32>
      %31 = arith.addf %28, %30 : vector<8x128xf32>
      %32 = math.tanh %31 : vector<8x128xf32>
      %c0_21 = arith.constant 0 : index
      %c0_22 = arith.constant 0 : index
      %33 = vector.load %arg8[%c0_21, %c0_22] : memref<256x128xf32, #tpu.memory_space<vmem>>, vector<128x128xf32>
      %cst_23 = arith.constant dense<0.000000e+00> : vector<8x128xf32>
      %34 = tpu.matmul %25, %33, %cst_23 {dimension_numbers = #tpu.dot_dimension_numbers<[1], [0], [0], [1], [0, 0, 1, 1], [], []>} : vector<8x128xf32>, vector<128x128xf32>, vector<8x128xf32> -> vector<8x128xf32>
      %c128 = arith.constant 128 : index
      %c0_24 = arith.constant 0 : index
      %35 = vector.load %arg8[%c128, %c0_24] : memref<256x128xf32, #tpu.memory_space<vmem>>, vector<128x128xf32>
      %cst_25 = arith.constant dense<0.000000e+00> : vector<8x128xf32>
      %36 = tpu.matmul %32, %35, %cst_25 {dimension_numbers = #tpu.dot_dimension_numbers<[1], [0], [0], [1], [0, 0, 1, 1], [], []>} : vector<8x128xf32>, vector<128x128xf32>, vector<8x128xf32> -> vector<8x128xf32>
      %37 = arith.addf %34, %36 : vector<8x128xf32>
      %c0_26 = arith.constant 0 : index
      %c0_27 = arith.constant 0 : index
      %38 = vector.load %arg9[%c0_26, %c0_27] : memref<1x128xf32, #tpu.memory_space<vmem>>, vector<1x128xf32>
      %39 = vector.broadcast %38 : vector<1x128xf32> to vector<8x128xf32>
      %40 = arith.addf %37, %39 : vector<8x128xf32>
      %41 = math.tanh %40 : vector<8x128xf32>
      %c0_28 = arith.constant 0 : index
      %c0_29 = arith.constant 0 : index
      %42 = vector.load %arg13[%c0_28, %c0_29] : memref<8x128xf32, #tpu.memory_space<vmem>>, vector<8x128xf32>
      tpu.vector_store %arg13[%c0_28, %c0_29], %41 {strides = array<i32>} : memref<8x128xf32, #tpu.memory_space<vmem>>, vector<8x128xf32>,
    } else {
    }
    %c256_i32 = arith.constant 256 : i32
    %3 = arith.muli %arg1, %c256_i32 : i32
    %4 = tpu.assume_multiple %3, 128 : i32
    %c0 = arith.constant 0 : index
    %5 = arith.index_cast %4 : i32 to index
    %6 = vector.load %arg10[%c0, %5] : memref<128x256xf32, #tpu.memory_space<vmem>>, vector<128x256xf32>
    %c0_1 = arith.constant 0 : index
    %7 = arith.index_cast %4 : i32 to index
    %8 = vector.load %arg11[%c0_1, %7] : memref<1x256xf32, #tpu.memory_space<vmem>>, vector<1x256xf32>
    %c0_2 = arith.constant 0 : index
    %c0_3 = arith.constant 0 : index
    %9 = vector.load %arg13[%c0_2, %c0_3] : memref<8x128xf32, #tpu.memory_space<vmem>>, vector<8x128xf32>
    %cst = arith.constant dense<0.000000e+00> : vector<8x256xf32>
    %10 = tpu.matmul %9, %6, %cst {dimension_numbers = #tpu.dot_dimension_numbers<[1], [0], [0], [1], [0, 0, 1, 1], [], []>} : vector<8x128xf32>, vector<128x256xf32>, vector<8x256xf32> -> vector<8x256xf32>
    %11 = vector.broadcast %8 : vector<1x256xf32> to vector<8x256xf32>
    %12 = arith.addf %10, %11 : vector<8x256xf32>
    %13 = arith.negf %12 : vector<8x256xf32>
    %14 = math.exp %13 : vector<8x256xf32>
    %cst_4 = arith.constant 1.000000e+00 : f32
    %15 = vector.broadcast %cst_4 : f32 to vector<8x256xf32>
    %16 = arith.addf %15, %14 : vector<8x256xf32>
    %17 = arith.divf %15, %16 : vector<8x256xf32>
    %c0_5 = arith.constant 0 : index
    %c0_6 = arith.constant 0 : index
    %18 = vector.load %arg12[%c0_5, %c0_6] : memref<8x256xf32, #tpu.memory_space<vmem>>, vector<8x256xf32>
    tpu.vector_store %arg12[%c0_5, %c0_6], %17 {strides = array<i32>} : memref<8x256xf32, #tpu.memory_space<vmem>>, vector<8x256xf32>,
    return
  }
  func.func @transform_0(%arg0: i32, %arg1: i32) -> (i32, i32) {
    %c0_i32 = arith.constant 0 : i32
    %c0_i32_0 = arith.constant 0 : i32
    return %arg0, %c0_i32 : i32, i32
  }
  func.func @transform_1(%arg0: i32, %arg1: i32) -> (i32, i32) {
    %c0_i32 = arith.constant 0 : i32
    %c0_i32_0 = arith.constant 0 : i32
    return %arg0, %c0_i32 : i32, i32
  }
  func.func @transform_2(%arg0: i32, %arg1: i32) -> (i32, i32) {
    %c0_i32 = arith.constant 0 : i32
    %c0_i32_0 = arith.constant 0 : i32
    %c0_i32_1 = arith.constant 0 : i32
    return %c0_i32, %c0_i32_0 : i32, i32
  }
  func.func @transform_3(%arg0: i32, %arg1: i32) -> (i32, i32) {
    %c0_i32 = arith.constant 0 : i32
    %c0_i32_0 = arith.constant 0 : i32
    %c0_i32_1 = arith.constant 0 : i32
    return %c0_i32, %c0_i32_0 : i32, i32
  }
  func.func @transform_4(%arg0: i32, %arg1: i32) -> (i32, i32) {
    %c0_i32 = arith.constant 0 : i32
    %c0_i32_0 = arith.constant 0 : i32
    %c0_i32_1 = arith.constant 0 : i32
    return %c0_i32, %c0_i32_0 : i32, i32
  }
  func.func @transform_5(%arg0: i32, %arg1: i32) -> (i32, i32) {
    %c0_i32 = arith.constant 0 : i32
    %c0_i32_0 = arith.constant 0 : i32
    %c0_i32_1 = arith.constant 0 : i32
    return %c0_i32, %c0_i32_0 : i32, i32
  }
  func.func @transform_6(%arg0: i32, %arg1: i32) -> (i32, i32) {
    %c0_i32 = arith.constant 0 : i32
    %c0_i32_0 = arith.constant 0 : i32
    %c0_i32_1 = arith.constant 0 : i32
    return %c0_i32, %c0_i32_0 : i32, i32
  }
  func.func @transform_7(%arg0: i32, %arg1: i32) -> (i32, i32) {
    %c0_i32 = arith.constant 0 : i32
    %c0_i32_0 = arith.constant 0 : i32
    %c0_i32_1 = arith.constant 0 : i32
    return %c0_i32, %c0_i32_0 : i32, i32
  }
  func.func @transform_8(%arg0: i32, %arg1: i32) -> (i32, i32) {
    %c0_i32 = arith.constant 0 : i32
    %c0_i32_0 = arith.constant 0 : i32
    %c0_i32_1 = arith.constant 0 : i32
    return %c0_i32, %c0_i32_0 : i32, i32
  }
  func.func @transform_9(%arg0: i32, %arg1: i32) -> (i32, i32) {
    %c0_i32 = arith.constant 0 : i32
    %c0_i32_0 = arith.constant 0 : i32
    %c0_i32_1 = arith.constant 0 : i32
    return %c0_i32, %c0_i32_0 : i32, i32
  }
  func.func @transform_10(%arg0: i32, %arg1: i32) -> (i32, i32) {
    %c0_i32 = arith.constant 0 : i32
    return %arg0, %arg1 : i32, i32
  }
}

</mosaic_0001>

<llo_original>
// kernel: tpu_custom_call.1
$region0: #{tpu_custom_call.1}
  #allocation0 [shape = 'u32[]', space=smem, size = 0x4, offset = 0x4, fixed_abs, tag = 'smem constant byte address 0x4 - core index']
  #allocation1 [shape = 'u32[144,128]{1,0:T(1,128)}', space=vmem, size = 0x12000, scoped, tag = 'internal scratch']
  #allocation2 [shape = 'f32[8,128]{1,0:T(8,128)}', space=vmem, size = 0x1000, scoped, tag = 'scratch operand']
  %s0 = inlined_call_operand.hbm [shape: f32[8,128], index: 0, kind: input, shape index: {}]
  %s1 = inlined_call_operand.hbm [shape: f32[8,256], index: 1, kind: input, shape index: {}]
  %s2 = inlined_call_operand.hbm [shape: f32[128,128], index: 2, kind: input, shape index: {}]
  %s3 = inlined_call_operand.hbm [shape: f32[1,128], index: 3, kind: input, shape index: {}]
  %s4 = inlined_call_operand.hbm [shape: f32[256,128], index: 4, kind: input, shape index: {}]
  %s5 = inlined_call_operand.hbm [shape: f32[1,128], index: 5, kind: input, shape index: {}]
  %s6 = inlined_call_operand.hbm [shape: f32[256,128], index: 6, kind: input, shape index: {}]
  %s7 = inlined_call_operand.hbm [shape: f32[1,128], index: 7, kind: input, shape index: {}]
  %s8 = inlined_call_operand.hbm [shape: f32[128,256], index: 8, kind: input, shape index: {}]
  %s9 = inlined_call_operand.hbm [shape: f32[1,256], index: 9, kind: input, shape index: {}]
  %s10 = inlined_call_operand.hbm [shape: f32[8,256], index: 10, kind: output, shape index: {}]
  %s11 = sld [smem:[#allocation0]]
  $region94: #{tpu_custom_call.1} parent=0
    _
  %s13 = ssub.s32 1, %s11
  %s14 = scalar_select 0, %s13, %s11
  $region1: #{tpu_custom_call.1} parent=0
    #allocation3 [shape = 'u8[4096]{0}', space=vmem, size = 0x1000, scoped, tag = 'input window, operand 0, single buffered']
    #allocation4 [shape = 's32[1]{0}', space=sflag, size = 0x4, scoped, tag = 'scoped memory for tpu_custom_call.1']
    #allocation5 [shape = 's32[1]{0}', space=sflag, size = 0x4, scoped, tag = 'scoped memory for tpu_custom_call.1']
    #allocation6 [shape = 'u8[8192]{0}', space=vmem, size = 0x2000, scoped, tag = 'input window, operand 1, single buffered']
    #allocation7 [shape = 's32[1]{0}', space=sflag, size = 0x4, scoped, tag = 'scoped memory for tpu_custom_call.1']
    #allocation8 [shape = 'u8[65536]{0}', space=vmem, size = 0x10000, scoped, tag = 'input window, operand 2, single buffered']
    #allocation9 [shape = 'u8[512]{0}', space=vmem, size = 0x400, scoped, tag = 'input window, operand 3, single buffered']
    #allocation10 [shape = 's32[1]{0}', space=sflag, size = 0x4, scoped, tag = 'scoped memory for tpu_custom_call.1']
    #allocation11 [shape = 'u8[131072]{0}', space=vmem, size = 0x20000, scoped, tag = 'input window, operand 4, single buffered']
    #allocation12 [shape = 'u8[512]{0}', space=vmem, size = 0x400, scoped, tag = 'input window, operand 5, single buffered']
    #allocation13 [shape = 's32[1]{0}', space=sflag, size = 0x4, scoped, tag = 'scoped memory for tpu_custom_call.1']
    #allocation14 [shape = 'u8[131072]{0}', space=vmem, size = 0x20000, scoped, tag = 'input window, operand 6, single buffered']
    #allocation15 [shape = 'u8[512]{0}', space=vmem, size = 0x400, scoped, tag = 'input window, operand 7, single buffered']
    #allocation16 [shape = 's32[1]{0}', space=sflag, size = 0x4, scoped, tag = 'scoped memory for tpu_custom_call.1']
    #allocation17 [shape = 'u8[131072]{0}', space=vmem, size = 0x20000, scoped, tag = 'input window, operand 8, single buffered']
    #allocation18 [shape = 'u8[1024]{0}', space=vmem, size = 0x400, scoped, tag = 'input window, operand 9, single buffered']
    #allocation19 [shape = 's32[1]{0}', space=sflag, size = 0x4, scoped, tag = 'scoped memory for tpu_custom_call.1']
    #allocation20 [shape = 'u8[8192]{0}', space=vmem, size = 0x2000, scoped, tag = 'output window, operand 0, single buffered']
    %15 = vsyncpa [#allocation4], 0
    %16 = vsyncpa [#allocation7], 0
    %17 = vsyncpa [#allocation10], 0
    %18 = vsyncpa [#allocation13], 0
    %19 = vsyncpa [#allocation16], 0
    %20 = vsyncpa [#allocation19], 0
    %21 = vsyncpa [#allocation5], 0
    // Predicated region
    $region2: #{tpu_custom_call.1} parent=1 // pred_check
      _
    $region3: #{tpu_custom_call.1} parent=1 // pred_check_branch
      %23 = sbr.rel (0) target = $region5
    $region4: #{tpu_custom_call.1} parent=1 // pred_region
      %s25 = ssub.s32 128, 128
      %26 = vsyncadd [#allocation4], %s25
      %s28 = sshll.u32 [#allocation3], 4
      %s29 = int_to_ptr.vmem [resolvable:$true] %s28
      %31 = dma.hbm_to_vmem [thread:$0]  %s0, 128, %s29, [#allocation4]
    $region5: #{tpu_custom_call.1} parent=1 // pred_fallthru
      _
    // Predicated region
    $region6: #{tpu_custom_call.1} parent=1 // pred_check
      _
    $region7: #{tpu_custom_call.1} parent=1 // pred_check_branch
      %33 = sbr.rel (0) target = $region9
    $region8: #{tpu_custom_call.1} parent=1 // pred_region
      %s35 = ssub.s32 256, 256
      %36 = vsyncadd [#allocation7], %s35
      %s38 = sshll.u32 [#allocation6], 4
      %s39 = int_to_ptr.vmem [resolvable:$true] %s38
      %41 = dma.hbm_to_vmem [thread:$0]  %s1, 256, %s39, [#allocation7]
    $region9: #{tpu_custom_call.1} parent=1 // pred_fallthru
      _
    // Predicated region
    $region10: #{tpu_custom_call.1} parent=1 // pred_check
      _
    $region11: #{tpu_custom_call.1} parent=1 // pred_check_branch
      %43 = sbr.rel (0) target = $region13
    $region12: #{tpu_custom_call.1} parent=1 // pred_region
      %s45 = ssub.s32 2048, 2048
      %46 = vsyncadd [#allocation7], %s45
      %s47 = sshll.u32 [#allocation8], 4
      %s48 = int_to_ptr.vmem [resolvable:$true] %s47
      %53 = dma.hbm_to_vmem [thread:$0]  %s2, 2048, %s48, [#allocation7], 128, 128, 8
    $region13: #{tpu_custom_call.1} parent=1 // pred_fallthru
      _
    // Predicated region
    $region14: #{tpu_custom_call.1} parent=1 // pred_check
      _
    $region15: #{tpu_custom_call.1} parent=1 // pred_check_branch
      %55 = sbr.rel (0) target = $region17
    $region16: #{tpu_custom_call.1} parent=1 // pred_region
      %s57 = ssub.s32 16, 16
      %58 = vsyncadd [#allocation10], %s57
      %s60 = sshll.u32 [#allocation9], 4
      %s61 = int_to_ptr.vmem [resolvable:$true] %s60
      %63 = dma.hbm_to_vmem [thread:$0]  %s3, 16, %s61, [#allocation10]
    $region17: #{tpu_custom_call.1} parent=1 // pred_fallthru
      _
    // Predicated region
    $region18: #{tpu_custom_call.1} parent=1 // pred_check
      _
    $region19: #{tpu_custom_call.1} parent=1 // pred_check_branch
      %65 = sbr.rel (0) target = $region21
    $region20: #{tpu_custom_call.1} parent=1 // pred_region
      %s67 = ssub.s32 4096, 4096
      %68 = vsyncadd [#allocation10], %s67
      %s69 = sshll.u32 [#allocation11], 4
      %s70 = int_to_ptr.vmem [resolvable:$true] %s69
      %75 = dma.hbm_to_vmem [thread:$0]  %s4, 4096, %s70, [#allocation10], 128, 128, 8
    $region21: #{tpu_custom_call.1} parent=1 // pred_fallthru
      _
    // Predicated region
    $region22: #{tpu_custom_call.1} parent=1 // pred_check
      _
    $region23: #{tpu_custom_call.1} parent=1 // pred_check_branch
      %77 = sbr.rel (0) target = $region25
    $region24: #{tpu_custom_call.1} parent=1 // pred_region
      %s79 = ssub.s32 16, 16
      %80 = vsyncadd [#allocation13], %s79
      %s82 = sshll.u32 [#allocation12], 4
      %s83 = int_to_ptr.vmem [resolvable:$true] %s82
      %85 = dma.hbm_to_vmem [thread:$0]  %s5, 16, %s83, [#allocation13]
    $region25: #{tpu_custom_call.1} parent=1 // pred_fallthru
      _
    // Predicated region
    $region26: #{tpu_custom_call.1} parent=1 // pred_check
      _
    $region27: #{tpu_custom_call.1} parent=1 // pred_check_branch
      %87 = sbr.rel (0) target = $region29
    $region28: #{tpu_custom_call.1} parent=1 // pred_region
      %s89 = ssub.s32 4096, 4096
      %90 = vsyncadd [#allocation13], %s89
      %s91 = sshll.u32 [#allocation14], 4
      %s92 = int_to_ptr.vmem [resolvable:$true] %s91
      %97 = dma.hbm_to_vmem [thread:$0]  %s6, 4096, %s92, [#allocation13], 128, 128, 8
    $region29: #{tpu_custom_call.1} parent=1 // pred_fallthru
      _
    // Predicated region
    $region30: #{tpu_custom_call.1} parent=1 // pred_check
      _
    $region31: #{tpu_custom_call.1} parent=1 // pred_check_branch
      %99 = sbr.rel (0) target = $region33
    $region32: #{tpu_custom_call.1} parent=1 // pred_region
      %s101 = ssub.s32 16, 16
      %102 = vsyncadd [#allocation16], %s101
      %s104 = sshll.u32 [#allocation15], 4
      %s105 = int_to_ptr.vmem [resolvable:$true] %s104
      %107 = dma.hbm_to_vmem [thread:$0]  %s7, 16, %s105, [#allocation16]
    $region33: #{tpu_custom_call.1} parent=1 // pred_fallthru
      _
    // Predicated region
    $region34: #{tpu_custom_call.1} parent=1 // pred_check
      _
    $region35: #{tpu_custom_call.1} parent=1 // pred_check_branch
      %109 = sbr.rel (0) target = $region37
    $region36: #{tpu_custom_call.1} parent=1 // pred_region
      %s111 = ssub.s32 4096, 4096
      %112 = vsyncadd [#allocation16], %s111
      %s113 = sshll.u32 [#allocation17], 4
      %s114 = int_to_ptr.vmem [resolvable:$true] %s113
      %119 = dma.hbm_to_vmem [thread:$0]  %s8, 4096, %s114, [#allocation16], 256, 256, 16
    $region37: #{tpu_custom_call.1} parent=1 // pred_fallthru
      _
    // Predicated region
    $region38: #{tpu_custom_call.1} parent=1 // pred_check
      _
    $region39: #{tpu_custom_call.1} parent=1 // pred_check_branch
      %121 = sbr.rel (0) target = $region41
    $region40: #{tpu_custom_call.1} parent=1 // pred_region
      %s123 = ssub.s32 32, 32
      %124 = vsyncadd [#allocation19], %s123
      %s126 = sshll.u32 [#allocation18], 4
      %s127 = int_to_ptr.vmem [resolvable:$true] %s126
      %129 = dma.hbm_to_vmem [thread:$0]  %s9, 32, %s127, [#allocation19]
    $region41: #{tpu_custom_call.1} parent=1 // pred_fallthru
      _
    // Predicated region
    $region42: #{tpu_custom_call.1} parent=1 // pred_check
      _
    $region43: #{tpu_custom_call.1} parent=1 // pred_check_branch
      %131 = sbr.rel (0) target = $region45
    $region44: #{tpu_custom_call.1} parent=1 // pred_region
      %132 = dma.done [#allocation4], 128
    $region45: #{tpu_custom_call.1} parent=1 // pred_fallthru
      _
    // Predicated region
    $region46: #{tpu_custom_call.1} parent=1 // pred_check
      _
    $region47: #{tpu_custom_call.1} parent=1 // pred_check_branch
      %134 = sbr.rel (0) target = $region49
    $region48: #{tpu_custom_call.1} parent=1 // pred_region
      %135 = dma.done [#allocation7], 256
    $region49: #{tpu_custom_call.1} parent=1 // pred_fallthru
      _
    // Predicated region
    $region50: #{tpu_custom_call.1} parent=1 // pred_check
      _
    $region51: #{tpu_custom_call.1} parent=1 // pred_check_branch
      %137 = sbr.rel (0) target = $region53
    $region52: #{tpu_custom_call.1} parent=1 // pred_region
      %138 = dma.done [#allocation7], 2048
    $region53: #{tpu_custom_call.1} parent=1 // pred_fallthru
      _
    // Predicated region
    $region54: #{tpu_custom_call.1} parent=1 // pred_check
      _
    $region55: #{tpu_custom_call.1} parent=1 // pred_check_branch
      %140 = sbr.rel (0) target = $region57
    $region56: #{tpu_custom_call.1} parent=1 // pred_region
      %141 = dma.done [#allocation10], 16
    $region57: #{tpu_custom_call.1} parent=1 // pred_fallthru
      _
    // Predicated region
    $region58: #{tpu_custom_call.1} parent=1 // pred_check
      _
    $region59: #{tpu_custom_call.1} parent=1 // pred_check_branch
      %143 = sbr.rel (0) target = $region61
    $region60: #{tpu_custom_call.1} parent=1 // pred_region
      %144 = dma.done [#allocation10], 4096
    $region61: #{tpu_custom_call.1} parent=1 // pred_fallthru
      _
    // Predicated region
    $region62: #{tpu_custom_call.1} parent=1 // pred_check
      _
    $region63: #{tpu_custom_call.1} parent=1 // pred_check_branch
      %146 = sbr.rel (0) target = $region65
    $region64: #{tpu_custom_call.1} parent=1 // pred_region
      %147 = dma.done [#allocation13], 16
    $region65: #{tpu_custom_call.1} parent=1 // pred_fallthru
      _
    // Predicated region
    $region66: #{tpu_custom_call.1} parent=1 // pred_check
      _
    $region67: #{tpu_custom_call.1} parent=1 // pred_check_branch
      %149 = sbr.rel (0) target = $region69
    $region68: #{tpu_custom_call.1} parent=1 // pred_region
      %150 = dma.done [#allocation13], 4096
    $region69: #{tpu_custom_call.1} parent=1 // pred_fallthru
      _
    // Predicated region
    $region70: #{tpu_custom_call.1} parent=1 // pred_check
      _
    $region71: #{tpu_custom_call.1} parent=1 // pred_check_branch
      %152 = sbr.rel (0) target = $region73
    $region72: #{tpu_custom_call.1} parent=1 // pred_region
      %153 = dma.done [#allocation16], 16
    $region73: #{tpu_custom_call.1} parent=1 // pred_fallthru
      _
    // Predicated region
    $region74: #{tpu_custom_call.1} parent=1 // pred_check
      _
    $region75: #{tpu_custom_call.1} parent=1 // pred_check_branch
      %155 = sbr.rel (0) target = $region77
    $region76: #{tpu_custom_call.1} parent=1 // pred_region
      %156 = dma.done [#allocation16], 4096
    $region77: #{tpu_custom_call.1} parent=1 // pred_fallthru
      _
    // Predicated region
    $region78: #{tpu_custom_call.1} parent=1 // pred_check
      _
    $region79: #{tpu_custom_call.1} parent=1 // pred_check_branch
      %158 = sbr.rel (0) target = $region81
    $region80: #{tpu_custom_call.1} parent=1 // pred_region
      %159 = dma.done [#allocation19], 32
    $region81: #{tpu_custom_call.1} parent=1 // pred_fallthru
      _
    %p160 = scmp.eq.s32.totalorder 0, 0
    // Predicated region
    $region82: #{tpu_custom_call.1} parent=1 // pred_check
      %p161 = pneg %p160
    $region83: #{tpu_custom_call.1} parent=1 // pred_check_branch
      %163 = sbr.rel (%p161) target = $region85
    $region84: #{tpu_custom_call.1} parent=1 // pred_region
      %v164 = vld [vmem:[#allocation3] sm:$0xff]
      %v165 = vld [vmem:[#allocation8] sm:$0xff]
      %v166 = vld [vmem:[#allocation8 + $0x8] sm:$0xff]
      %v167 = vld [vmem:[#allocation8 + $0x10] sm:$0xff]
      %v168 = vld [vmem:[#allocation8 + $0x18] sm:$0xff]
      %v169 = vld [vmem:[#allocation8 + $0x20] sm:$0xff]
      %v170 = vld [vmem:[#allocation8 + $0x28] sm:$0xff]
      %v171 = vld [vmem:[#allocation8 + $0x30] sm:$0xff]
      %v172 = vld [vmem:[#allocation8 + $0x38] sm:$0xff]
      %v173 = vld [vmem:[#allocation8 + $0x40] sm:$0xff]
      %v174 = vld [vmem:[#allocation8 + $0x48] sm:$0xff]
      %v175 = vld [vmem:[#allocation8 + $0x50] sm:$0xff]
      %v176 = vld [vmem:[#allocation8 + $0x58] sm:$0xff]
      %v177 = vld [vmem:[#allocation8 + $0x60] sm:$0xff]
      %v178 = vld [vmem:[#allocation8 + $0x68] sm:$0xff]
      %v179 = vld [vmem:[#allocation8 + $0x70] sm:$0xff]
      %v180 = vld [vmem:[#allocation8 + $0x78] sm:$0xff]
      %v181 = vld [vmem:[#allocation9] sm:$0x1]
      %v183 = vlaneseq
      %v184 = vshrl.u32 %v183, 7
      %v185 = vsub.s32 0, %v184
      %v186 = vrot.slane %v181, %v185
      %188 = vmatprep.subr.mxu0 0.0
      %189 = vmatpush1.msra.mxu0 %v165
      %190 = vmatprep.subr.mxu0 0.0
      %191 = vmatpush1.msra.mxu0 %v166
      %192 = vmatprep.subr.mxu0 0.0
      %193 = vmatpush1.msra.mxu0 %v167
      %194 = vmatprep.subr.mxu0 0.0
      %195 = vmatpush1.msra.mxu0 %v168
      %196 = vmatprep.subr.mxu0 0.0
      %197 = vmatpush1.msra.mxu0 %v169
      %198 = vmatprep.subr.mxu0 0.0
      %199 = vmatpush1.msra.mxu0 %v170
      %200 = vmatprep.subr.mxu0 0.0
      %201 = vmatpush1.msra.mxu0 %v171
      %202 = vmatprep.subr.mxu0 0.0
      %203 = vmatpush1.msra.mxu0 %v172
      %204 = vmatprep.subr.mxu0 0.0
      %205 = vmatpush1.msra.mxu0 %v173
      %206 = vmatprep.subr.mxu0 0.0
      %207 = vmatpush1.msra.mxu0 %v174
      %208 = vmatprep.subr.mxu0 0.0
      %209 = vmatpush1.msra.mxu0 %v175
      %210 = vmatprep.subr.mxu0 0.0
      %211 = vmatpush1.msra.mxu0 %v176
      %212 = vmatprep.subr.mxu0 0.0
      %213 = vmatpush1.msra.mxu0 %v177
      %214 = vmatprep.subr.mxu0 0.0
      %215 = vmatpush1.msra.mxu0 %v178
      %216 = vmatprep.subr.mxu0 0.0
      %217 = vmatpush1.msra.mxu0 %v179
      %218 = vmatprep.subr.mxu0 0.0
      %219 = vmatpush1.msra.mxu0 %v180
      %220 = vmatprep.subr.mxu0 0.0
      %221 = vmatpush1.msra.mxu0 0.0
      %222 = vmatprep.subr.mxu0 0.0
      %223 = vmatpush1.msra.mxu0 0.0
      %224 = vmatprep.subr.mxu0 0.0
      %225 = vmatpush1.msra.mxu0 0.0
      %226 = vmatprep.subr.mxu0 0.0
      %227 = vmatpush1.msra.mxu0 0.0
      %228 = vmatprep.subr.mxu0 0.0
      %229 = vmatpush1.msra.mxu0 0.0
      %230 = vmatprep.subr.mxu0 0.0
      %231 = vmatpush1.msra.mxu0 0.0
      %232 = vmatprep.subr.mxu0 0.0
      %233 = vmatpush1.msra.mxu0 0.0
      %234 = vmatprep.subr.mxu0 0.0
      %235 = vmatpush1.msra.mxu0 0.0
      %236 = vmatprep.subr.mxu0 0.0
      %237 = vmatpush1.msra.mxu0 0.0
      %238 = vmatprep.subr.mxu0 0.0
      %239 = vmatpush1.msra.mxu0 0.0
      %240 = vmatprep.subr.mxu0 0.0
      %241 = vmatpush1.msra.mxu0 0.0
      %242 = vmatprep.subr.mxu0 0.0
      %243 = vmatpush1.msra.mxu0 0.0
      %244 = vmatprep.subr.mxu0 0.0
      %245 = vmatpush1.msra.mxu0 0.0
      %246 = vmatprep.subr.mxu0 0.0
      %247 = vmatpush1.msra.mxu0 0.0
      %248 = vmatprep.subr.mxu0 0.0
      %249 = vmatpush1.msra.mxu0 0.0
      %250 = vmatprep.subr.mxu0 0.0
      %251 = vmatpush1.msra.mxu0 0.0
      %252 = vmatprep.mubr.f32.mxu0 0.0
      %253 = vmatmul.mubr.f32.gmra.mrb[0].mxu0 %v164
      %v254 = vpop.f32.mrb[0].mxu0
      %v255 = vadd.f32 %v186, %v254
      %v256 = vpop.f32.mrb[0].mxu0
      %257 = vdwg.mxu0
      %v258 = vtanh.pop %v255
      %v259 = vld [vmem:[#allocation6] sm:$0xff]
      %v260 = vld [vmem:[#allocation6 + $0x8] sm:$0xff]
      %v261 = vld [vmem:[#allocation11] sm:$0xff]
      %v262 = vld [vmem:[#allocation11 + $0x8] sm:$0xff]
      %v263 = vld [vmem:[#allocation11 + $0x10] sm:$0xff]
      %v264 = vld [vmem:[#allocation11 + $0x18] sm:$0xff]
      %v265 = vld [vmem:[#allocation11 + $0x20] sm:$0xff]
      %v266 = vld [vmem:[#allocation11 + $0x28] sm:$0xff]
      %v267 = vld [vmem:[#allocation11 + $0x30] sm:$0xff]
      %v268 = vld [vmem:[#allocation11 + $0x38] sm:$0xff]
      %v269 = vld [vmem:[#allocation11 + $0x40] sm:$0xff]
      %v270 = vld [vmem:[#allocation11 + $0x48] sm:$0xff]
      %v271 = vld [vmem:[#allocation11 + $0x50] sm:$0xff]
      %v272 = vld [vmem:[#allocation11 + $0x58] sm:$0xff]
      %v273 = vld [vmem:[#allocation11 + $0x60] sm:$0xff]
      %v274 = vld [vmem:[#allocation11 + $0x68] sm:$0xff]
      %v275 = vld [vmem:[#allocation11 + $0x70] sm:$0xff]
      %v276 = vld [vmem:[#allocation11 + $0x78] sm:$0xff]
      %v277 = vld [vmem:[#allocation11 + $0x80] sm:$0xff]
      %v278 = vld [vmem:[#allocation11 + $0x88] sm:$0xff]
      %v279 = vld [vmem:[#allocation11 + $0x90] sm:$0xff]
      %v280 = vld [vmem:[#allocation11 + $0x98] sm:$0xff]
      %v281 = vld [vmem:[#allocation11 + $0xa0] sm:$0xff]
      %v282 = vld [vmem:[#allocation11 + $0xa8] sm:$0xff]
      %v283 = vld [vmem:[#allocation11 + $0xb0] sm:$0xff]
      %v284 = vld [vmem:[#allocation11 + $0xb8] sm:$0xff]
      %v285 = vld [vmem:[#allocation11 + $0xc0] sm:$0xff]
      %v286 = vld [vmem:[#allocation11 + $0xc8] sm:$0xff]
      %v287 = vld [vmem:[#allocation11 + $0xd0] sm:$0xff]
      %v288 = vld [vmem:[#allocation11 + $0xd8] sm:$0xff]
      %v289 = vld [vmem:[#allocation11 + $0xe0] sm:$0xff]
      %v290 = vld [vmem:[#allocation11 + $0xe8] sm:$0xff]
      %v291 = vld [vmem:[#allocation11 + $0xf0] sm:$0xff]
      %v292 = vld [vmem:[#allocation11 + $0xf8] sm:$0xff]
      %v293 = vld [vmem:[#allocation12] sm:$0x1]
      %v295 = vlaneseq
      %v296 = vshrl.u32 %v295, 7
      %v297 = vsub.s32 0, %v296
      %v298 = vrot.slane %v293, %v297
      %300 = vmatprep.subr.mxu0 0.0
      %301 = vmatpush1.msra.mxu0 %v261
      %302 = vmatprep.subr.mxu0 0.0
      %303 = vmatpush1.msra.mxu0 %v262
      %304 = vmatprep.subr.mxu0 0.0
      %305 = vmatpush1.msra.mxu0 %v263
      %306 = vmatprep.subr.mxu0 0.0
      %307 = vmatpush1.msra.mxu0 %v264
      %308 = vmatprep.subr.mxu0 0.0
      %309 = vmatpush1.msra.mxu0 %v265
      %310 = vmatprep.subr.mxu0 0.0
      %311 = vmatpush1.msra.mxu0 %v266
      %312 = vmatprep.subr.mxu0 0.0
      %313 = vmatpush1.msra.mxu0 %v267
      %314 = vmatprep.subr.mxu0 0.0
      %315 = vmatpush1.msra.mxu0 %v268
      %316 = vmatprep.subr.mxu0 0.0
      %317 = vmatpush1.msra.mxu0 %v269
      %318 = vmatprep.subr.mxu0 0.0
      %319 = vmatpush1.msra.mxu0 %v270
      %320 = vmatprep.subr.mxu0 0.0
      %321 = vmatpush1.msra.mxu0 %v271
      %322 = vmatprep.subr.mxu0 0.0
      %323 = vmatpush1.msra.mxu0 %v272
      %324 = vmatprep.subr.mxu0 0.0
      %325 = vmatpush1.msra.mxu0 %v273
      %326 = vmatprep.subr.mxu0 0.0
      %327 = vmatpush1.msra.mxu0 %v274
      %328 = vmatprep.subr.mxu0 0.0
      %329 = vmatpush1.msra.mxu0 %v275
      %330 = vmatprep.subr.mxu0 0.0
      %331 = vmatpush1.msra.mxu0 %v276
      %332 = vmatprep.subr.mxu0 0.0
      %333 = vmatpush1.msra.mxu0 %v277
      %334 = vmatprep.subr.mxu0 0.0
      %335 = vmatpush1.msra.mxu0 %v278
      %336 = vmatprep.subr.mxu0 0.0
      %337 = vmatpush1.msra.mxu0 %v279
      %338 = vmatprep.subr.mxu0 0.0
      %339 = vmatpush1.msra.mxu0 %v280
      %340 = vmatprep.subr.mxu0 0.0
      %341 = vmatpush1.msra.mxu0 %v281
      %342 = vmatprep.subr.mxu0 0.0
      %343 = vmatpush1.msra.mxu0 %v282
      %344 = vmatprep.subr.mxu0 0.0
      %345 = vmatpush1.msra.mxu0 %v283
      %346 = vmatprep.subr.mxu0 0.0
      %347 = vmatpush1.msra.mxu0 %v284
      %348 = vmatprep.subr.mxu0 0.0
      %349 = vmatpush1.msra.mxu0 %v285
      %350 = vmatprep.subr.mxu0 0.0
      %351 = vmatpush1.msra.mxu0 %v286
      %352 = vmatprep.subr.mxu0 0.0
      %353 = vmatpush1.msra.mxu0 %v287
      %354 = vmatprep.subr.mxu0 0.0
      %355 = vmatpush1.msra.mxu0 %v288
      %356 = vmatprep.subr.mxu0 0.0
      %357 = vmatpush1.msra.mxu0 %v289
      %358 = vmatprep.subr.mxu0 0.0
      %359 = vmatpush1.msra.mxu0 %v290
      %360 = vmatprep.subr.mxu0 0.0
      %361 = vmatpush1.msra.mxu0 %v291
      %362 = vmatprep.subr.mxu0 0.0
      %363 = vmatpush1.msra.mxu0 %v292
      %364 = vmatprep.mubr.f32.mxu0 %v260
      %365 = vmatmul.mubr.f32.gmra.mrb[0].mxu0 %v259
      %v366 = vpop.f32.mrb[0].mxu0
      %v367 = vadd.f32 %v298, %v366
      %v368 = vpop.f32.mrb[0].mxu0
      %369 = vdwg.mxu0
      %v370 = vtanh.pop %v367
      %v371 = vld [vmem:[#allocation14] sm:$0xff]
      %v372 = vld [vmem:[#allocation14 + $0x8] sm:$0xff]
      %v373 = vld [vmem:[#allocation14 + $0x10] sm:$0xff]
      %v374 = vld [vmem:[#allocation14 + $0x18] sm:$0xff]
      %v375 = vld [vmem:[#allocation14 + $0x20] sm:$0xff]
      %v376 = vld [vmem:[#allocation14 + $0x28] sm:$0xff]
      %v377 = vld [vmem:[#allocation14 + $0x30] sm:$0xff]
      %v378 = vld [vmem:[#allocation14 + $0x38] sm:$0xff]
      %v379 = vld [vmem:[#allocation14 + $0x40] sm:$0xff]
      %v380 = vld [vmem:[#allocation14 + $0x48] sm:$0xff]
      %v381 = vld [vmem:[#allocation14 + $0x50] sm:$0xff]
      %v382 = vld [vmem:[#allocation14 + $0x58] sm:$0xff]
      %v383 = vld [vmem:[#allocation14 + $0x60] sm:$0xff]
      %v384 = vld [vmem:[#allocation14 + $0x68] sm:$0xff]
      %v385 = vld [vmem:[#allocation14 + $0x70] sm:$0xff]
      %v386 = vld [vmem:[#allocation14 + $0x78] sm:$0xff]
      %v387 = vld [vmem:[#allocation14 + $0x80] sm:$0xff]
      %v388 = vld [vmem:[#allocation14 + $0x88] sm:$0xff]
      %v389 = vld [vmem:[#allocation14 + $0x90] sm:$0xff]
      %v390 = vld [vmem:[#allocation14 + $0x98] sm:$0xff]
      %v391 = vld [vmem:[#allocation14 + $0xa0] sm:$0xff]
      %v392 = vld [vmem:[#allocation14 + $0xa8] sm:$0xff]
      %v393 = vld [vmem:[#allocation14 + $0xb0] sm:$0xff]
      %v394 = vld [vmem:[#allocation14 + $0xb8] sm:$0xff]
      %v395 = vld [vmem:[#allocation14 + $0xc0] sm:$0xff]
      %v396 = vld [vmem:[#allocation14 + $0xc8] sm:$0xff]
      %v397 = vld [vmem:[#allocation14 + $0xd0] sm:$0xff]
      %v398 = vld [vmem:[#allocation14 + $0xd8] sm:$0xff]
      %v399 = vld [vmem:[#allocation14 + $0xe0] sm:$0xff]
      %v400 = vld [vmem:[#allocation14 + $0xe8] sm:$0xff]
      %v401 = vld [vmem:[#allocation14 + $0xf0] sm:$0xff]
      %v402 = vld [vmem:[#allocation14 + $0xf8] sm:$0xff]
      %403 = vmatprep.subr.mxu0 0.0
      %404 = vmatpush1.msra.mxu0 %v387
      %405 = vmatprep.subr.mxu0 0.0
      %406 = vmatpush1.msra.mxu0 %v388
      %407 = vmatprep.subr.mxu0 0.0
      %408 = vmatpush1.msra.mxu0 %v389
      %409 = vmatprep.subr.mxu0 0.0
      %410 = vmatpush1.msra.mxu0 %v390
      %411 = vmatprep.subr.mxu0 0.0
      %412 = vmatpush1.msra.mxu0 %v391
      %413 = vmatprep.subr.mxu0 0.0
      %414 = vmatpush1.msra.mxu0 %v392
      %415 = vmatprep.subr.mxu0 0.0
      %416 = vmatpush1.msra.mxu0 %v393
      %417 = vmatprep.subr.mxu0 0.0
      %418 = vmatpush1.msra.mxu0 %v394
      %419 = vmatprep.subr.mxu0 0.0
      %420 = vmatpush1.msra.mxu0 %v395
      %421 = vmatprep.subr.mxu0 0.0
      %422 = vmatpush1.msra.mxu0 %v396
      %423 = vmatprep.subr.mxu0 0.0
      %424 = vmatpush1.msra.mxu0 %v397
      %425 = vmatprep.subr.mxu0 0.0
      %426 = vmatpush1.msra.mxu0 %v398
      %427 = vmatprep.subr.mxu0 0.0
      %428 = vmatpush1.msra.mxu0 %v399
      %429 = vmatprep.subr.mxu0 0.0
      %430 = vmatpush1.msra.mxu0 %v400
      %431 = vmatprep.subr.mxu0 0.0
      %432 = vmatpush1.msra.mxu0 %v401
      %433 = vmatprep.subr.mxu0 0.0
      %434 = vmatpush1.msra.mxu0 %v402
      %435 = vmatprep.subr.mxu0 0.0
      %436 = vmatpush1.msra.mxu0 0.0
      %437 = vmatprep.subr.mxu0 0.0
      %438 = vmatpush1.msra.mxu0 0.0
      %439 = vmatprep.subr.mxu0 0.0
      %440 = vmatpush1.msra.mxu0 0.0
      %441 = vmatprep.subr.mxu0 0.0
      %442 = vmatpush1.msra.mxu0 0.0
      %443 = vmatprep.subr.mxu0 0.0
      %444 = vmatpush1.msra.mxu0 0.0
      %445 = vmatprep.subr.mxu0 0.0
      %446 = vmatpush1.msra.mxu0 0.0
      %447 = vmatprep.subr.mxu0 0.0
      %448 = vmatpush1.msra.mxu0 0.0
      %449 = vmatprep.subr.mxu0 0.0
      %450 = vmatpush1.msra.mxu0 0.0
      %451 = vmatprep.subr.mxu0 0.0
      %452 = vmatpush1.msra.mxu0 0.0
      %453 = vmatprep.subr.mxu0 0.0
      %454 = vmatpush1.msra.mxu0 0.0
      %455 = vmatprep.subr.mxu0 0.0
      %456 = vmatpush1.msra.mxu0 0.0
      %457 = vmatprep.subr.mxu0 0.0
      %458 = vmatpush1.msra.mxu0 0.0
      %459 = vmatprep.subr.mxu0 0.0
      %460 = vmatpush1.msra.mxu0 0.0
      %461 = vmatprep.subr.mxu0 0.0
      %462 = vmatpush1.msra.mxu0 0.0
      %463 = vmatprep.subr.mxu0 0.0
      %464 = vmatpush1.msra.mxu0 0.0
      %465 = vmatprep.subr.mxu0 0.0
      %466 = vmatpush1.msra.mxu0 0.0
      %467 = vmatprep.mubr.f32.mxu0 0.0
      %468 = vmatmul.mubr.f32.gmra.mrb[0].mxu0 %v370
      %v469 = vpop.f32.mrb[0].mxu0
      %v470 = vadd.f32 0.0, %v469
      %v471 = vpop.f32.mrb[0].mxu0
      %472 = vdwg.mxu0
      %473 = vmatprep.subr.mxu0 0.0
      %474 = vmatpush1.msra.mxu0 %v371
      %475 = vmatprep.subr.mxu0 0.0
      %476 = vmatpush1.msra.mxu0 %v372
      %477 = vmatprep.subr.mxu0 0.0
      %478 = vmatpush1.msra.mxu0 %v373
      %479 = vmatprep.subr.mxu0 0.0
      %480 = vmatpush1.msra.mxu0 %v374
      %481 = vmatprep.subr.mxu0 0.0
      %482 = vmatpush1.msra.mxu0 %v375
      %483 = vmatprep.subr.mxu0 0.0
      %484 = vmatpush1.msra.mxu0 %v376
      %485 = vmatprep.subr.mxu0 0.0
      %486 = vmatpush1.msra.mxu0 %v377
      %487 = vmatprep.subr.mxu0 0.0
      %488 = vmatpush1.msra.mxu0 %v378
      %489 = vmatprep.subr.mxu0 0.0
      %490 = vmatpush1.msra.mxu0 %v379
      %491 = vmatprep.subr.mxu0 0.0
      %492 = vmatpush1.msra.mxu0 %v380
      %493 = vmatprep.subr.mxu0 0.0
      %494 = vmatpush1.msra.mxu0 %v381
      %495 = vmatprep.subr.mxu0 0.0
      %496 = vmatpush1.msra.mxu0 %v382
      %497 = vmatprep.subr.mxu0 0.0
      %498 = vmatpush1.msra.mxu0 %v383
      %499 = vmatprep.subr.mxu0 0.0
      %500 = vmatpush1.msra.mxu0 %v384
      %501 = vmatprep.subr.mxu0 0.0
      %502 = vmatpush1.msra.mxu0 %v385
      %503 = vmatprep.subr.mxu0 0.0
      %504 = vmatpush1.msra.mxu0 %v386
      %505 = vmatprep.subr.mxu0 0.0
      %506 = vmatpush1.msra.mxu0 0.0
      %507 = vmatprep.subr.mxu0 0.0
      %508 = vmatpush1.msra.mxu0 0.0
      %509 = vmatprep.subr.mxu0 0.0
      %510 = vmatpush1.msra.mxu0 0.0
      %511 = vmatprep.subr.mxu0 0.0
      %512 = vmatpush1.msra.mxu0 0.0
      %513 = vmatprep.subr.mxu0 0.0
      %514 = vmatpush1.msra.mxu0 0.0
      %515 = vmatprep.subr.mxu0 0.0
      %516 = vmatpush1.msra.mxu0 0.0
      %517 = vmatprep.subr.mxu0 0.0
      %518 = vmatpush1.msra.mxu0 0.0
      %519 = vmatprep.subr.mxu0 0.0
      %520 = vmatpush1.msra.mxu0 0.0
      %521 = vmatprep.subr.mxu0 0.0
      %522 = vmatpush1.msra.mxu0 0.0
      %523 = vmatprep.subr.mxu0 0.0
      %524 = vmatpush1.msra.mxu0 0.0
      %525 = vmatprep.subr.mxu0 0.0
      %526 = vmatpush1.msra.mxu0 0.0
      %527 = vmatprep.subr.mxu0 0.0
      %528 = vmatpush1.msra.mxu0 0.0
      %529 = vmatprep.subr.mxu0 0.0
      %530 = vmatpush1.msra.mxu0 0.0
      %531 = vmatprep.subr.mxu0 0.0
      %532 = vmatpush1.msra.mxu0 0.0
      %533 = vmatprep.subr.mxu0 0.0
      %534 = vmatpush1.msra.mxu0 0.0
      %535 = vmatprep.subr.mxu0 0.0
      %536 = vmatpush1.msra.mxu0 0.0
      %537 = vmatprep.mubr.f32.mxu0 0.0
      %538 = vmatmul.mubr.f32.gmra.mrb[0].mxu0 %v258
      %v539 = vpop.f32.mrb[0].mxu0
      %v540 = vadd.f32 %v470, %v539
      %v541 = vpop.f32.mrb[0].mxu0
      %542 = vdwg.mxu0
      %v543 = vld [vmem:[#allocation15] sm:$0x1]
      %v545 = vlaneseq
      %v546 = vshrl.u32 %v545, 7
      %v547 = vsub.s32 0, %v546
      %v548 = vrot.slane %v543, %v547
      %v550 = vadd.f32 %v540, %v548
      %v551 = vtanh.pop %v550
      %552 = vst [vmem:[#allocation2] sm:$0xff] %v551
    $region85: #{tpu_custom_call.1} parent=1 // pred_fallthru
      _
    %s553 = smul.u32 0, 256
    %s554 = sshra.s32 %s553, 7
    %s555 = sand.u32 %s553, 127
    %s556 = smul.addr %s554, 8
    %s557 = scalar_lea.vmem [#allocation17], %s556
    %v558 = vld [vmem:[%s557] sm:$0xff]
    %v559 = vld [vmem:[%s557 + $0x8] sm:$0xff]
    %v560 = vld [vmem:[%s557 + $0x10] sm:$0xff]
    %v561 = vld [vmem:[%s557 + $0x18] sm:$0xff]
    %v562 = vld [vmem:[%s557 + $0x20] sm:$0xff]
    %v563 = vld [vmem:[%s557 + $0x28] sm:$0xff]
    %v564 = vld [vmem:[%s557 + $0x30] sm:$0xff]
    %v565 = vld [vmem:[%s557 + $0x38] sm:$0xff]
    %v566 = vld [vmem:[%s557 + $0x40] sm:$0xff]
    %v567 = vld [vmem:[%s557 + $0x48] sm:$0xff]
    %v568 = vld [vmem:[%s557 + $0x50] sm:$0xff]
    %v569 = vld [vmem:[%s557 + $0x58] sm:$0xff]
    %v570 = vld [vmem:[%s557 + $0x60] sm:$0xff]
    %v571 = vld [vmem:[%s557 + $0x68] sm:$0xff]
    %v572 = vld [vmem:[%s557 + $0x70] sm:$0xff]
    %v573 = vld [vmem:[%s557 + $0x78] sm:$0xff]
    %v574 = vld [vmem:[%s557 + $0x80] sm:$0xff]
    %v575 = vld [vmem:[%s557 + $0x88] sm:$0xff]
    %v576 = vld [vmem:[%s557 + $0x90] sm:$0xff]
    %v577 = vld [vmem:[%s557 + $0x98] sm:$0xff]
    %v578 = vld [vmem:[%s557 + $0xa0] sm:$0xff]
    %v579 = vld [vmem:[%s557 + $0xa8] sm:$0xff]
    %v580 = vld [vmem:[%s557 + $0xb0] sm:$0xff]
    %v581 = vld [vmem:[%s557 + $0xb8] sm:$0xff]
    %v582 = vld [vmem:[%s557 + $0xc0] sm:$0xff]
    %v583 = vld [vmem:[%s557 + $0xc8] sm:$0xff]
    %v584 = vld [vmem:[%s557 + $0xd0] sm:$0xff]
    %v585 = vld [vmem:[%s557 + $0xd8] sm:$0xff]
    %v586 = vld [vmem:[%s557 + $0xe0] sm:$0xff]
    %v587 = vld [vmem:[%s557 + $0xe8] sm:$0xff]
    %v588 = vld [vmem:[%s557 + $0xf0] sm:$0xff]
    %v589 = vld [vmem:[%s557 + $0xf8] sm:$0xff]
    %s590 = scalar_lea.vmem [#allocation18], %s554
    %v591 = vld [vmem:[%s590] sm:$0x3]
    %v592 = vld [vmem:[#allocation2] sm:$0xff]
    %v594 = vlaneseq
    %v595 = vshrl.u32 %v594, 7
    %v596 = vsub.s32 0, %v595
    %v597 = vrot.slane %v591, %v596
    %v598 = vlaneseq
    %v599 = vshrl.u32 %v598, 7
    %v600 = vsub.s32 1, %v599
    %v601 = vrot.slane %v591, %v600
    %604 = vmatprep.subr.mxu0 %v559
    %605 = vmatpush1.msra.mxu0 %v558
    %606 = vmatprep.subr.mxu0 %v561
    %607 = vmatpush1.msra.mxu0 %v560
    %608 = vmatprep.subr.mxu0 %v563
    %609 = vmatpush1.msra.mxu0 %v562
    %610 = vmatprep.subr.mxu0 %v565
    %611 = vmatpush1.msra.mxu0 %v564
    %612 = vmatprep.subr.mxu0 %v567
    %613 = vmatpush1.msra.mxu0 %v566
    %614 = vmatprep.subr.mxu0 %v569
    %615 = vmatpush1.msra.mxu0 %v568
    %616 = vmatprep.subr.mxu0 %v571
    %617 = vmatpush1.msra.mxu0 %v570
    %618 = vmatprep.subr.mxu0 %v573
    %619 = vmatpush1.msra.mxu0 %v572
    %620 = vmatprep.subr.mxu0 %v575
    %621 = vmatpush1.msra.mxu0 %v574
    %622 = vmatprep.subr.mxu0 %v577
    %623 = vmatpush1.msra.mxu0 %v576
    %624 = vmatprep.subr.mxu0 %v579
    %625 = vmatpush1.msra.mxu0 %v578
    %626 = vmatprep.subr.mxu0 %v581
    %627 = vmatpush1.msra.mxu0 %v580
    %628 = vmatprep.subr.mxu0 %v583
    %629 = vmatpush1.msra.mxu0 %v582
    %630 = vmatprep.subr.mxu0 %v585
    %631 = vmatpush1.msra.mxu0 %v584
    %632 = vmatprep.subr.mxu0 %v587
    %633 = vmatpush1.msra.mxu0 %v586
    %634 = vmatprep.subr.mxu0 %v589
    %635 = vmatpush1.msra.mxu0 %v588
    %636 = vmatprep.subr.mxu0 0.0
    %637 = vmatpush1.msra.mxu0 0.0
    %638 = vmatprep.subr.mxu0 0.0
    %639 = vmatpush1.msra.mxu0 0.0
    %640 = vmatprep.subr.mxu0 0.0
    %641 = vmatpush1.msra.mxu0 0.0
    %642 = vmatprep.subr.mxu0 0.0
    %643 = vmatpush1.msra.mxu0 0.0
    %644 = vmatprep.subr.mxu0 0.0
    %645 = vmatpush1.msra.mxu0 0.0
    %646 = vmatprep.subr.mxu0 0.0
    %647 = vmatpush1.msra.mxu0 0.0
    %648 = vmatprep.subr.mxu0 0.0
    %649 = vmatpush1.msra.mxu0 0.0
    %650 = vmatprep.subr.mxu0 0.0
    %651 = vmatpush1.msra.mxu0 0.0
    %652 = vmatprep.subr.mxu0 0.0
    %653 = vmatpush1.msra.mxu0 0.0
    %654 = vmatprep.subr.mxu0 0.0
    %655 = vmatpush1.msra.mxu0 0.0
    %656 = vmatprep.subr.mxu0 0.0
    %657 = vmatpush1.msra.mxu0 0.0
    %658 = vmatprep.subr.mxu0 0.0
    %659 = vmatpush1.msra.mxu0 0.0
    %660 = vmatprep.subr.mxu0 0.0
    %661 = vmatpush1.msra.mxu0 0.0
    %662 = vmatprep.subr.mxu0 0.0
    %663 = vmatpush1.msra.mxu0 0.0
    %664 = vmatprep.subr.mxu0 0.0
    %665 = vmatpush1.msra.mxu0 0.0
    %666 = vmatprep.subr.mxu0 0.0
    %667 = vmatpush1.msra.mxu0 0.0
    %668 = vmatprep.mubr.f32.mxu0 0.0
    %669 = vmatmul.mubr.f32.gmra.mrb[0].mxu0 %v592
    %v670 = vpop.f32.mrb[0].mxu0
    %v671 = vadd.f32 %v597, %v670
    %v672 = vpop.f32.mrb[0].mxu0
    %v673 = vadd.f32 %v601, %v672
    %674 = vdwg.mxu0
    %v675 = vxor.u32 %v671, 2147483648
    %v676 = vxor.u32 %v673, 2147483648
    %v677 = vmul.f32 %v675, 1.442695
    %v678 = vpow.pop %v677
    %v679 = vmul.f32 %v676, 1.442695
    %v680 = vpow.pop %v679
    %v681 = vadd.f32 %v678, 1.0
    %v682 = vadd.f32 %v680, 1.0
    %v683 = vrcp.pop %v681
    %v684 = vmul.f32 1.0, %v683
    %v685 = vrcp.pop %v682
    %v686 = vmul.f32 1.0, %v685
    %687 = vst [vmem:[#allocation20] sm:$0xff] %v684
    %688 = vst [vmem:[#allocation20 + $0x8] sm:$0xff] %v686
    // Predicated region
    $region86: #{tpu_custom_call.1} parent=1 // pred_check
      _
    $region87: #{tpu_custom_call.1} parent=1 // pred_check_branch
      %690 = sbr.rel (0) target = $region89
    $region88: #{tpu_custom_call.1} parent=1 // pred_region
      %s692 = ssub.s32 256, 256
      %693 = vsyncadd [#allocation5], %s692
      %s695 = sshll.u32 [#allocation20], 4
      %s696 = int_to_ptr.vmem [resolvable:$true] %s695
      %698 = dma.vmem_to_hbm [thread:$0]  %s696, 256, %s10, [#allocation5]
    $region89: #{tpu_custom_call.1} parent=1 // pred_fallthru
      _
    // Predicated region
    $region90: #{tpu_custom_call.1} parent=1 // pred_check
      _
    $region91: #{tpu_custom_call.1} parent=1 // pred_check_branch
      %700 = sbr.rel (0) target = $region93
    $region92: #{tpu_custom_call.1} parent=1 // pred_region
      %701 = dma.done [#allocation5], 256
    $region93: #{tpu_custom_call.1} parent=1 // pred_fallthru
      _
    %702 = vsyncpa [#allocation4], 1
    %703 = vsyncpa [#allocation7], 1
    %704 = vsyncpa [#allocation10], 1
    %705 = vsyncpa [#allocation13], 1
    %706 = vsyncpa [#allocation16], 1
    %707 = vsyncpa [#allocation19], 1
    %708 = vsyncpa [#allocation5], 1

</llo_original>
